<compile_context>
chip_gen: v6e
topology: v6e:2x2x1
jax: 0.10.0
libtpu: 0.0.40
codegen_flags: <defaults>
</compile_context>

<pallas_src>
import functools

import jax
import jax.numpy as jnp
from jax.experimental import pallas as pl
from jax.experimental.pallas import tpu as pltpu


def _embed_gather_kernel(ids_ref, *refs, use_mask):
    # ids_ref : (N_pad,) int32 in SMEM (scalar prefetch; used for DMA addressing)
    # if use_mask: refs = (mask_ref(T,1) f32, w_hbm(V,Dp) ANY, out_ref(T,Dp),
    #                      wbuf(2,T,Dp) VMEM, sems(2,T) DMA)
    # else:        refs = (w_hbm, out_ref, wbuf, sems)
    if use_mask:
        mask_ref, w_hbm, out_ref, wbuf, sems = refs
    else:
        mask_ref = None
        w_hbm, out_ref, wbuf, sems = refs

    g = pl.program_id(0)
    j = pl.program_id(1)
    J = pl.num_programs(1)
    T = out_ref.shape[0]
    blk = g * J + j            # global block index
    slot = j % 2               # double-buffer slot used by this block

    def start_fetch(block_idx, slot_idx):
        base = block_idx * T

        @pl.loop(0, T)
        def _(t):
            tok = ids_ref[base + t]
            pltpu.make_async_copy(
                w_hbm.at[pl.ds(tok, 1), :],
                wbuf.at[slot_idx, pl.ds(t, 1), :],
                sems.at[slot_idx, t],
            ).start()

    # Prime the pipeline at the start of each chunk (fires once per g -> safe
    # even when the g axis is sharded across TensorCores).
    @pl.when(j == 0)
    def _():
        start_fetch(blk, slot)

    # Prefetch next block's rows into the other slot while this block is in flight.
    @pl.when(j + 1 < J)
    def _():
        start_fetch(blk + 1, 1 - slot)

    # Wait for this block's T row gathers.
    @pl.loop(0, T)
    def _(t):
        pltpu.make_async_copy(
            w_hbm.at[pl.ds(0, 1), :],            # shape donor only (same bytes)
            wbuf.at[slot, pl.ds(t, 1), :],
            sems.at[slot, t],
        ).wait()

    rows = wbuf[slot]                            # (T, D_pad) in weight dtype
    if use_mask:
        # mask is built in f32; multiply in f32 then cast (bf16-safe).
        rows = (rows.astype(jnp.float32) * mask_ref[...]).astype(out_ref.dtype)
    else:
        rows = rows.astype(out_ref.dtype)
    out_ref[...] = rows


def _round_up(x, m):
    return (x + m - 1) // m * m


def embedding_dropout(ids, weight, *, drop_p=0.5, training=True, mask_key=None,
                      block_tokens=128, num_parallel=2):
    """Pallas implementation of EmbeddingDropout.forward.

    ids: (B, S) integer token ids (assumed in-range; no runtime bounds check).
    weight: (V, D) embedding table.
    """
    B, S = ids.shape
    V, D = weight.shape
    N = B * S
    flat_ids = ids.reshape(N).astype(jnp.int32)

    # ---- grid geometry: G parallel chunks x J blocks x T tokens per block ----
    G = max(1, int(num_parallel))
    per_chunk = -(-N // G)                                   # ceil(N / G)
    T = max(8, min(int(block_tokens), _round_up(per_chunk, 8)))
    J = -(-per_chunk // T)                                   # ceil(per_chunk / T)
    N_pad = G * J * T

    if N_pad != N:
        flat_ids = jnp.concatenate(
            [flat_ids, jnp.zeros((N_pad - N,), jnp.int32)])  # pad with valid token 0

    # ---- pad D to a lane-dense multiple of 128 (e.g. AWD-LSTM emb_sz=400) ----
    D_pad = _round_up(D, 128)
    w = weight if D_pad == D else jnp.pad(weight, ((0, 0), (0, D_pad - D)))

    # ---- dropout mask (training only): per-token (N_pad, 1) f32 scale ----
    use_mask = bool(training) and drop_p > 0.0
    if use_mask:
        if mask_key is None:
            raise ValueError("training=True requires mask_key for the dropout mask")
        keep_p = 1.0 - drop_p
        keep = jax.random.bernoulli(mask_key, p=keep_p, shape=(V,))
        word_mask = keep.astype(jnp.float32) / jnp.float32(keep_p)   # (V,)
        tok_mask = word_mask[flat_ids][:, None]                      # (N_pad, 1)

    blk_idx = lambda g, j, ids_sref: (g * J + j, 0)

    in_specs = []
    args = [flat_ids]
    if use_mask:
        in_specs.append(pl.BlockSpec((T, 1), blk_idx))       # per-token mask (VMEM)
        args.append(tok_mask)
    in_specs.append(pl.BlockSpec(memory_space=pl.ANY))       # weight stays in HBM
    args.append(w)

    out_flat = pl.pallas_call(
        functools.partial(_embed_gather_kernel, use_mask=use_mask),
        grid_spec=pltpu.PrefetchScalarGridSpec(
            num_scalar_prefetch=1,       # flat ids -> SMEM for DMA addressing
            grid=(G, J),
            in_specs=in_specs,
            out_specs=pl.BlockSpec((T, D_pad), blk_idx),
            scratch_shapes=[
                pltpu.VMEM((2, T, D_pad), weight.dtype),     # double-buffered gather
                pltpu.SemaphoreType.DMA((2, T)),              # one sem per row per slot
            ],
        ),
        out_shape=jax.ShapeDtypeStruct((N_pad, D_pad), weight.dtype),
        compiler_params=pltpu.CompilerParams(
            dimension_semantics=("parallel", "arbitrary"),
        ),
    )(*args)

    return out_flat[:N, :D].reshape(B, S, D)


if __name__ == "__main__":
    key = jax.random.PRNGKey(0)
    k_w, k_ids, k_mask = jax.random.split(key, 3)

    # small shapes consistent with an embedding lookup
    V, D = 64, 128         # vocab size, embedding dim
    B, S = 2, 8            # batch, sequence length
    drop_p = 0.5

    # deterministic parameter init (synthetic nn.Embedding weight, padding_idx=0 row zeroed)
    weight = jax.random.normal(k_w, (V, D), dtype=jnp.float32)
    weight = weight.at[0].set(0.0)

    ids = jax.random.randint(k_ids, (B, S), 0, V, dtype=jnp.int32)

    out_train = embedding_dropout(ids, weight, drop_p=drop_p, training=True,
                                  mask_key=k_mask)
    out_eval = embedding_dropout(ids, weight, drop_p=drop_p, training=False)
    out_train, out_eval = jax.block_until_ready((out_train, out_eval))

    # pure-JAX references (same mask draw)
    keep = jax.random.bernoulli(k_mask, p=1.0 - drop_p, shape=(V,))
    word_mask = keep.astype(jnp.float32) / (1.0 - drop_p)
    ref_train = (weight * word_mask[:, None])[ids]
    ref_eval = weight[ids]

    assert out_train.shape == (B, S, D) and out_eval.shape == (B, S, D)
    assert jnp.allclose(out_train, ref_train), "train-mode mismatch vs reference"
    assert jnp.allclose(out_eval, ref_eval), "eval-mode mismatch vs reference"
    print("KERNEL_OK")
</pallas_src>

<mosaic_0001>
module attributes {stable_mosaic.version = 11 : i64} {
  func.func @_embed_gather_kernel(%arg0: i32, %arg1: i32, %arg2: memref<16xi32, #tpu.memory_space<smem>>, %arg3: memref<8x1xf32, #tpu.memory_space<vmem>>, %arg4: memref<64x128xf32, #tpu.memory_space<any>>, %arg5: memref<8x128xf32, #tpu.memory_space<vmem>>, %arg6: memref<2x8x128xf32, #tpu.memory_space<vmem>>, %arg7: memref<2x8x!tpu.dma_semaphore, #tpu.memory_space<semaphore_mem>>) attributes {dimension_semantics = [#tpu.dimension_semantics<parallel>, #tpu.dimension_semantics<arbitrary>], iteration_bounds = array<i64: 2, 1>, scalar_prefetch = 1 : i64, scratch_operands = 2 : i64, tpu.core_type = #tpu.core_type<tc>, window_params = [{transform_indices = @transform_0, window_bounds = array<i64: 8, 1>}, {}, {transform_indices = @transform_2, window_bounds = array<i64: 8, 128>}]} {
    %c1_i32 = arith.constant 1 : i32
    %0 = arith.muli %arg0, %c1_i32 : i32
    %1 = arith.addi %0, %arg1 : i32
    %c2_i32 = arith.constant 2 : i32
    %c0_i32 = arith.constant 0 : i32
    %2 = arith.cmpi eq, %c2_i32, %c0_i32 : i32
    %c1_i32_0 = arith.constant 1 : i32
    %3 = arith.select %2, %c1_i32_0, %c2_i32 : i32
    %4 = arith.remsi %arg1, %3 : i32
    %c0_i32_1 = arith.constant 0 : i32
    %5 = arith.cmpi ne, %4, %c0_i32_1 : i32
    %c0_i32_2 = arith.constant 0 : i32
    %6 = arith.cmpi slt, %4, %c0_i32_2 : i32
    %c0_i32_3 = arith.constant 0 : i32
    %7 = arith.cmpi slt, %3, %c0_i32_3 : i32
    %8 = arith.xori %6, %7 : i1
    %9 = arith.andi %8, %5 : i1
    %10 = arith.addi %4, %3 : i32
    %11 = arith.select %9, %10, %4 : i32
    %c0_i32_4 = arith.constant 0 : i32
    %12 = arith.cmpi eq, %arg1, %c0_i32_4 : i32
    %13 = arith.extui %12 : i1 to i32
    %c0_i32_5 = arith.constant 0 : i32
    %14 = arith.cmpi ne, %13, %c0_i32_5 : i32
    scf.if %14 {
      %c8_i32_17 = arith.constant 8 : i32
      %27 = arith.muli %1, %c8_i32_17 : i32
      %c0_i32_18 = arith.constant 0 : i32
      %c8_i32_19 = arith.constant 8 : i32
      %28 = arith.addi %c0_i32_18, %c8_i32_19 : i32
      %c1_i32_20 = arith.constant 1 : i32
      scf.for %arg8 = %c0_i32_18 to %28 step %c1_i32_20  : i32 {
        %c1_i32_22 = arith.constant 1 : i32
        %29 = arith.muli %arg8, %c1_i32_22 : i32
        %c0_i32_23 = arith.constant 0 : i32
        %30 = arith.addi %c0_i32_23, %29 : i32
        %31 = arith.addi %27, %30 : i32
        %32 = arith.index_cast %31 : i32 to index
        %33 = memref.load %arg2[%32] : memref<16xi32, #tpu.memory_space<smem>>
        %c0_i32_24 = arith.constant 0 : i32
        %34 = tpu.memref_slice %arg4[%33, %c0_i32_24] : memref<64x128xf32, #tpu.memory_space<any>> -> memref<1x128xf32, #tpu.memory_space<any>>
        %c0_i32_25 = arith.constant 0 : i32
        %35 = tpu.memref_slice %arg6[%11, %30, %c0_i32_25] : memref<2x8x128xf32, #tpu.memory_space<vmem>> -> memref<1x1x128xf32, #tpu.memory_space<vmem>>
        %36 = tpu.memref_squeeze %35 : memref<1x1x128xf32, #tpu.memory_space<vmem>> -> memref<1x128xf32, #tpu.memory_space<vmem>>
        %37 = tpu.memref_slice %arg7[%11, %30] : memref<2x8x!tpu.dma_semaphore, #tpu.memory_space<semaphore_mem>> -> memref<1x1x!tpu.dma_semaphore, #tpu.memory_space<semaphore_mem>>
        %38 = tpu.memref_squeeze %37 : memref<1x1x!tpu.dma_semaphore, #tpu.memory_space<semaphore_mem>> -> memref<!tpu.dma_semaphore, #tpu.memory_space<semaphore_mem>>
        tpu.enqueue_dma source(%34 : memref<1x128xf32, #tpu.memory_space<any>>) target(%36 : memref<1x128xf32, #tpu.memory_space<vmem>>) target_semaphore(%38 : memref<!tpu.dma_semaphore, #tpu.memory_space<semaphore_mem>>)
      }
      %c8_i32_21 = arith.constant 8 : i32
    } else {
    }
    %c1_i32_6 = arith.constant 1 : i32
    %15 = arith.addi %arg1, %c1_i32_6 : i32
    %c1_i32_7 = arith.constant 1 : i32
    %16 = arith.cmpi slt, %15, %c1_i32_7 : i32
    %17 = arith.extui %16 : i1 to i32
    %c0_i32_8 = arith.constant 0 : i32
    %18 = arith.cmpi ne, %17, %c0_i32_8 : i32
    scf.if %18 {
      %c1_i32_17 = arith.constant 1 : i32
      %27 = arith.addi %1, %c1_i32_17 : i32
      %c1_i32_18 = arith.constant 1 : i32
      %28 = arith.subi %c1_i32_18, %11 : i32
      %c8_i32_19 = arith.constant 8 : i32
      %29 = arith.muli %27, %c8_i32_19 : i32
      %c0_i32_20 = arith.constant 0 : i32
      %c8_i32_21 = arith.constant 8 : i32
      %30 = arith.addi %c0_i32_20, %c8_i32_21 : i32
      %c1_i32_22 = arith.constant 1 : i32
      scf.for %arg8 = %c0_i32_20 to %30 step %c1_i32_22  : i32 {
        %c1_i32_24 = arith.constant 1 : i32
        %31 = arith.muli %arg8, %c1_i32_24 : i32
        %c0_i32_25 = arith.constant 0 : i32
        %32 = arith.addi %c0_i32_25, %31 : i32
        %33 = arith.addi %29, %32 : i32
        %34 = arith.index_cast %33 : i32 to index
        %35 = memref.load %arg2[%34] : memref<16xi32, #tpu.memory_space<smem>>
        %c0_i32_26 = arith.constant 0 : i32
        %36 = tpu.memref_slice %arg4[%35, %c0_i32_26] : memref<64x128xf32, #tpu.memory_space<any>> -> memref<1x128xf32, #tpu.memory_space<any>>
        %c0_i32_27 = arith.constant 0 : i32
        %37 = tpu.memref_slice %arg6[%28, %32, %c0_i32_27] : memref<2x8x128xf32, #tpu.memory_space<vmem>> -> memref<1x1x128xf32, #tpu.memory_space<vmem>>
        %38 = tpu.memref_squeeze %37 : memref<1x1x128xf32, #tpu.memory_space<vmem>> -> memref<1x128xf32, #tpu.memory_space<vmem>>
        %39 = tpu.memref_slice %arg7[%28, %32] : memref<2x8x!tpu.dma_semaphore, #tpu.memory_space<semaphore_mem>> -> memref<1x1x!tpu.dma_semaphore, #tpu.memory_space<semaphore_mem>>
        %40 = tpu.memref_squeeze %39 : memref<1x1x!tpu.dma_semaphore, #tpu.memory_space<semaphore_mem>> -> memref<!tpu.dma_semaphore, #tpu.memory_space<semaphore_mem>>
        tpu.enqueue_dma source(%36 : memref<1x128xf32, #tpu.memory_space<any>>) target(%38 : memref<1x128xf32, #tpu.memory_space<vmem>>) target_semaphore(%40 : memref<!tpu.dma_semaphore, #tpu.memory_space<semaphore_mem>>)
      }
      %c8_i32_23 = arith.constant 8 : i32
    } else {
    }
    %c0_i32_9 = arith.constant 0 : i32
    %c8_i32 = arith.constant 8 : i32
    %19 = arith.addi %c0_i32_9, %c8_i32 : i32
    %c1_i32_10 = arith.constant 1 : i32
    scf.for %arg8 = %c0_i32_9 to %19 step %c1_i32_10  : i32 {
      %c1_i32_17 = arith.constant 1 : i32
      %27 = arith.muli %arg8, %c1_i32_17 : i32
      %c0_i32_18 = arith.constant 0 : i32
      %28 = arith.addi %c0_i32_18, %27 : i32
      %c0_i32_19 = arith.constant 0 : i32
      %c0_i32_20 = arith.constant 0 : i32
      %29 = tpu.memref_slice %arg4[%c0_i32_19, %c0_i32_20] : memref<64x128xf32, #tpu.memory_space<any>> -> memref<1x128xf32, #tpu.memory_space<any>>
      %c0_i32_21 = arith.constant 0 : i32
      %30 = tpu.memref_slice %arg6[%11, %28, %c0_i32_21] : memref<2x8x128xf32, #tpu.memory_space<vmem>> -> memref<1x1x128xf32, #tpu.memory_space<vmem>>
      %31 = tpu.memref_squeeze %30 : memref<1x1x128xf32, #tpu.memory_space<vmem>> -> memref<1x128xf32, #tpu.memory_space<vmem>>
      %32 = tpu.memref_slice %arg7[%11, %28] : memref<2x8x!tpu.dma_semaphore, #tpu.memory_space<semaphore_mem>> -> memref<1x1x!tpu.dma_semaphore, #tpu.memory_space<semaphore_mem>>
      %33 = tpu.memref_squeeze %32 : memref<1x1x!tpu.dma_semaphore, #tpu.memory_space<semaphore_mem>> -> memref<!tpu.dma_semaphore, #tpu.memory_space<semaphore_mem>>
      tpu.wait_dma2 semaphore(%33 : memref<!tpu.dma_semaphore, #tpu.memory_space<semaphore_mem>>) src(%29 : memref<1x128xf32, #tpu.memory_space<any>>) dst(%31 : memref<1x128xf32, #tpu.memory_space<vmem>>)
    }
    %c8_i32_11 = arith.constant 8 : i32
    %20 = arith.index_cast %11 : i32 to index
    %c0 = arith.constant 0 : index
    %c0_12 = arith.constant 0 : index
    %21 = vector.load %arg6[%20, %c0, %c0_12] : memref<2x8x128xf32, #tpu.memory_space<vmem>>, vector<1x8x128xf32>
    %22 = vector.shape_cast %21 : vector<1x8x128xf32> to vector<8x128xf32>
    %c0_13 = arith.constant 0 : index
    %c0_14 = arith.constant 0 : index
    %23 = vector.load %arg3[%c0_13, %c0_14] : memref<8x1xf32, #tpu.memory_space<vmem>>, vector<8x1xf32>
    %24 = vector.broadcast %23 : vector<8x1xf32> to vector<8x128xf32>
    %25 = arith.mulf %22, %24 : vector<8x128xf32>
    %c0_15 = arith.constant 0 : index
    %c0_16 = arith.constant 0 : index
    %26 = vector.load %arg5[%c0_15, %c0_16] : memref<8x128xf32, #tpu.memory_space<vmem>>, vector<8x128xf32>
    tpu.vector_store %arg5[%c0_15, %c0_16], %25 {strides = array<i32>} : memref<8x128xf32, #tpu.memory_space<vmem>>, vector<8x128xf32>,
    return
  }
  func.func @transform_0(%arg0: i32, %arg1: i32, %arg2: memref<16xi32, #tpu.memory_space<smem>>) -> (i32, i32) {
    %c1_i32 = arith.constant 1 : i32
    %0 = arith.muli %arg0, %c1_i32 : i32
    %1 = arith.addi %0, %arg1 : i32
    %c0_i32 = arith.constant 0 : i32
    %c0_i32_0 = arith.constant 0 : i32
    return %1, %c0_i32 : i32, i32
  }
  func.func @transform_2(%arg0: i32, %arg1: i32, %arg2: memref<16xi32, #tpu.memory_space<smem>>) -> (i32, i32) {
    %c1_i32 = arith.constant 1 : i32
    %0 = arith.muli %arg0, %c1_i32 : i32
    %1 = arith.addi %0, %arg1 : i32
    %c0_i32 = arith.constant 0 : i32
    %c0_i32_0 = arith.constant 0 : i32
    return %1, %c0_i32 : i32, i32
  }
}

</mosaic_0001>

<llo_original>
// kernel: tpu_custom_call.1
$region0: #{tpu_custom_call.1}
  #allocation0 [shape = 'u32[]', space=smem, size = 0x4, offset = 0x4, fixed_abs, tag = 'smem constant byte address 0x4 - core index']
  #allocation1 [shape = 'u32[144,128]{1,0:T(1,128)}', space=vmem, size = 0x12000, scoped, tag = 'internal scratch']
  #allocation2 [shape = 'f32[2,8,128]{2,1,0:T(8,128)}', space=vmem, size = 0x2000, scoped, tag = 'scratch operand']
  #allocation3 [shape = 's32[16]{0}', space=sflag, size = 0x40, scoped, tag = 'scratch operand']
  #allocation4 [shape = 's32[1]{0}', space=sflag, size = 0x4, scoped, tag = 'scoped memory for tpu_custom_call.1']
  #allocation5 [shape = 'u8[512]{0}', space=smem, size = 0x200, scoped, tag = 'prefetched SMEM operand 0']
  #allocation8 [shape = 's32[]', space=sflag, size = 0x4, offset = 0, fixed_abs, tag = 'sflag constant byte address 0x0 - dummy sync flag']
  #allocation9 [shape = 's32[]', space=sflag, size = 0x4, offset = 0, fixed_abs, tag = 'sflag constant byte address 0x0 - dummy sync flag']
  #allocation10 [shape = 'u32[]', space=smem, size = 0x4, offset = 0x44, fixed_abs, tag = 'smem constant byte address 0x44 - assertion arg 0']
  #allocation11 [shape = 'u32[]', space=smem, size = 0x4, offset = 0x48, fixed_abs, tag = 'smem constant byte address 0x48 - assertion arg 1']
  #allocation12 [shape = 's32[]', space=sflag, size = 0x4, offset = 0, fixed_abs, tag = 'sflag constant byte address 0x0 - dummy sync flag']
  #allocation13 [shape = 's32[]', space=sflag, size = 0x4, offset = 0, fixed_abs, tag = 'sflag constant byte address 0x0 - dummy sync flag']
  %s0 = inlined_call_operand.vmem [shape: s32[16], index: 0, kind: input, shape index: {}]
  %s1 = inlined_call_operand.vmem [shape: f32[16,1], index: 1, kind: input, shape index: {}]
  %s2 = inlined_call_operand.hbm [shape: f32[64,128], index: 2, kind: input, shape index: {}]
  %s3 = inlined_call_operand.hbm [shape: f32[16,128], index: 3, kind: output, shape index: {}]
  %s4 = sld [smem:[#allocation0]]
  $region74: #{tpu_custom_call.1} parent=0
    _
  %s6 = ssub.s32 1, %s4
  %s7 = scalar_select 0, %s6, %s4
  %s8 = sshll.u32 %s0, 4
  %s9 = int_to_ptr.vmem [resolvable:$true] %s8
  %11 = dma.vmem_to_smem %s9, 16, [#allocation5], [#allocation4]
  %12 = dma.done [#allocation4], 16
  %13 = sfence
  $region1: #{tpu_custom_call.1} parent=0
    #allocation6 [shape = 'u8[8192]{0}', space=vmem, size = 0x2000, scoped, tag = 'output window, operand 0']
    #allocation7 [shape = 's32[2]{0}', space=sflag, size = 0x8, scoped, tag = 'scoped memory for tpu_custom_call.1']
    %14 = vsyncpa [#allocation7], 0
    %s15 = scalar_lea.sflag [#allocation7], 1
    %16 = vsyncpa %s15, 0
    loop: start=0, step=1, limit=4
    $region2: #{tpu_custom_call.1} parent=1 // loop_pre_header
      _
    $region3: #{tpu_custom_call.1} parent=1 // loop_header
      %s18 = sphi 0, %s22
      %p19 = scmp.ge.s32.totalorder %s18, 4
      %s25 = sphi 0, %s37
      %s26 = sphi 0, %s33
      %s27 = sphi 0, %s25
      %s28 = sphi 0, %s26
      %s29 = sphi 0, %s27
      %s30 = sphi 0, %s28
      %s42 = sphi 0, %s44
      %s45 = sphi 0, %s42
      %s46 = sphi 0, %s45
      %s62 = sphi 0, %s46
      %s70 = sphi 0, %s72
      %s73 = sphi 0, %s70
      %s74 = sphi 0, %s73
      %s90 = sphi 0, %s74
    $region4: #{tpu_custom_call.1} parent=1 // loop_header_branch
      %21 = sbr.rel (%p19) target = $region8
    $region5: #{tpu_custom_call.1} parent=1 // loop_body
      %s23 = ssub.s32 %s18, 1
      %s24 = ssub.s32 %s18, 2
      %s31 = sadd.s32 1, %s26
      %p32 = scmp.ge.s32.totalorder %s31, 1
      %s33 = scalar_select %p32, 0, %s31
      %s34 = sadd.s32 1, %s25
      %s35 = scalar_select %p32, %s34, %s25
      %p36 = scmp.ge.s32.totalorder %s35, 2
      %s37 = scalar_select %p36, 0, %s35
      %s38 = sadd.s32 %s25, %s26
      %s39 = sadd.s32 %s37, %s33
      %s40 = ssub.s32 %s38, %s39
      %p41 = scmp.eq.s32.totalorder %s40, 0
      %s43 = sadd.s32 %s42, 1
      %s44 = scalar_select %p41, %s42, %s43
      %p47 = pneg %p41
      %p48 = scmp.eq.s32.totalorder %s18, 1
      %p49 = por %p47, %p48
      %p50 = scmp.ne.s32.totalorder %s42, %s45
      %p51 = scmp.eq.s32.totalorder %s18, 0
      %p52 = por %p50, %p51
      %p53 = scmp.ne.s32.totalorder %s42, %s45
      %p54 = scmp.eq.s32.totalorder %s23, 1
      %p55 = por %p53, %p54
      %p56 = scmp.ne.s32.totalorder %s45, %s46
      %p57 = scmp.eq.s32.totalorder %s23, 0
      %p58 = por %p56, %p57
      %p59 = scmp.ne.s32.totalorder %s45, %s46
      %p60 = scmp.eq.s32.totalorder %s24, 1
      %p61 = por %p59, %p60
      %p63 = scmp.ne.s32.totalorder %s46, %s62
      %p64 = scmp.eq.s32.totalorder %s24, 0
      %p65 = por %p63, %p64
      %s66 = sadd.s32 %s25, %s26
      %s67 = sadd.s32 %s37, %s33
      %s68 = ssub.s32 %s66, %s67
      %p69 = scmp.eq.s32.totalorder %s68, 0
      %s71 = sadd.s32 %s70, 1
      %s72 = scalar_select %p69, %s70, %s71
      %p75 = pneg %p69
      %p76 = scmp.eq.s32.totalorder %s18, 1
      %p77 = por %p75, %p76
      %p78 = scmp.ne.s32.totalorder %s70, %s73
      %p79 = scmp.eq.s32.totalorder %s18, 0
      %p80 = por %p78, %p79
      %p81 = scmp.ne.s32.totalorder %s70, %s73
      %p82 = scmp.eq.s32.totalorder %s23, 1
      %p83 = por %p81, %p82
      %p84 = scmp.ne.s32.totalorder %s73, %s74
      %p85 = scmp.eq.s32.totalorder %s23, 0
      %p86 = por %p84, %p85
      %p87 = scmp.ne.s32.totalorder %s73, %s74
      %p88 = scmp.eq.s32.totalorder %s24, 1
      %p89 = por %p87, %p88
      %p91 = scmp.ne.s32.totalorder %s74, %s90
      %p92 = scmp.eq.s32.totalorder %s24, 0
      %p93 = por %p91, %p92
      %p94 = scmp.le.s32.totalorder 1, %s18
      %p95 = scmp.lt.s32.totalorder %s18, 3
      %p96 = pnand %p94, %p95
      %p97 = pneg %p96
      // Predicated region
      $region9: #{tpu_custom_call.1} parent=5 // pred_check
        _
      $region10: #{tpu_custom_call.1} parent=5 // pred_check_branch
        %99 = sbr.rel (%p96) target = $region12
      $region11: #{tpu_custom_call.1} parent=5 // pred_region
        %s100 = ssub.s32 %s18, 1
      $region12: #{tpu_custom_call.1} parent=5 // pred_fallthru
        _
      %p101 = scmp.lt.s32.totalorder %s18, 2
      // Predicated region
      $region13: #{tpu_custom_call.1} parent=5 // pred_check
        %p102 = pneg %p101
      $region14: #{tpu_custom_call.1} parent=5 // pred_check_branch
        %104 = sbr.rel (%p102) target = $region16
      $region15: #{tpu_custom_call.1} parent=5 // pred_region
        // Predicated region
        $region17: #{tpu_custom_call.1} parent=15 // pred_check
          %p105 = pneg %p52
        $region18: #{tpu_custom_call.1} parent=15 // pred_check_branch
          %107 = sbr.rel (%p105) target = $region20
        $region19: #{tpu_custom_call.1} parent=15 // pred_region
          %s108 = sadd.s32 %s25, %s26
          %p109 = scmp.lt.s32.totalorder %s108, 1
          %s110 = scalar_select %p109, %s108, 1
          %s111 = smul.addr %s110, 8
          %s112 = scalar_lea.vmem %s1, %s111
          %s113 = sadd.s32 %s25, %s26
        $region20: #{tpu_custom_call.1} parent=15 // pred_fallthru
          _
      $region16: #{tpu_custom_call.1} parent=5 // pred_fallthru
        _
      %p114 = scmp.le.s32.totalorder 1, %s18
      %p115 = scmp.lt.s32.totalorder %s18, 3
      %p116 = pnand %p114, %p115
      %p117 = pneg %p116
      // Predicated region
      $region21: #{tpu_custom_call.1} parent=5 // pred_check
        _
      $region22: #{tpu_custom_call.1} parent=5 // pred_check_branch
        %119 = sbr.rel (%p116) target = $region24
      $region23: #{tpu_custom_call.1} parent=5 // pred_region
        %s120 = ssub.s32 %s18, 1
        %s121 = sadd.s32 %s27, %s28
        %p122 = scmp.lt.s32.totalorder %s121, 1
        %s123 = scalar_select %p122, %s121, 1
        %s124 = smul.addr %s123, 8
        %s125 = scalar_lea.vmem %s1, %s124
        %p126 = pneg %p58
        %p127 = pneg %p55
        %p128 = pneg %p86
        %p129 = pneg %p83
        %s130 = sand.u32 %s73, 1
        %s131 = scalar_lea.sflag [#allocation7], %s130
        %s132 = sand.u32 %s73, 1
        %s133 = smul.addr %s132, 8
        %s134 = scalar_lea.vmem [#allocation6], %s133
        %s135 = sadd.s32 %s27, %s28
        %p136 = scmp.lt.s32.totalorder %s135, 1
        %s137 = scalar_select %p136, %s135, 1
        %s138 = smul.addr %s137, 8
        %s139 = scalar_lea.vmem %s1, %s138
        %s140 = sadd.s32 %s27, %s28
        %s141 = sadd.s32 %s27, %s28
        %s142 = sadd.s32 %s27, %s28
        %p143 = scmp.lt.s32.totalorder %s28, 0
        %s144 = ssub.s32 0, %s28
        %s145 = scalar_select %p143, %s144, %s28
        %s146 = sand.u32 %s145, 1
        %s147 = ssub.s32 0, %s146
        %s148 = scalar_select %p143, %s147, %s146
        %p149 = scmp.ne.s32.totalorder %s148, 0
        %p150 = scmp.lt.s32.totalorder %s148, 0
        %p151 = pnand %p150, %p149
        %p152 = pneg %p151
        %s153 = sadd.s32 %s148, 2
        %s154 = scalar_select %p152, %s153, %s148
        %p155 = scmp.eq.s32.totalorder %s28, 0
        // Predicated region
        $region25: #{tpu_custom_call.1} parent=23 // pred_check
          %p156 = pneg %p155
        $region26: #{tpu_custom_call.1} parent=23 // pred_check_branch
          %158 = sbr.rel (%p156) target = $region28
        $region27: #{tpu_custom_call.1} parent=23 // pred_region
          %s159 = smul.u32 %s142, 8
          loop: start=0, step=1, limit=8
          $region29: #{tpu_custom_call.1} parent=27 // loop_pre_header
            _
          $region30: #{tpu_custom_call.1} parent=27 // loop_header
            %s161 = sphi 0, %s165
            %p162 = scmp.ge.s32.totalorder %s161, 8
          $region31: #{tpu_custom_call.1} parent=27 // loop_header_branch
            %164 = sbr.rel (%p162) target = $region35
          $region32: #{tpu_custom_call.1} parent=27 // loop_body
            %s166 = sadd.s32 %s159, %s161
            %s167 = sld [smem:[#allocation5 + %s166]]
            %s168 = smul.addr %s167, 16
            %s169 = scalar_lea.hbm %s2, %s168
            %s170 = smul.u32 %s154, 8
            %s171 = sadd.s32 %s161, %s170
            %s172 = scalar_lea.vmem [#allocation2], %s171
            %s173 = scalar_lea.sflag [#allocation3], %s171
            // Predicated region
            $region36: #{tpu_custom_call.1} parent=32 // pred_check
              _
            $region37: #{tpu_custom_call.1} parent=32 // pred_check_branch
              %175 = sbr.rel target = $region39
            $region38: #{tpu_custom_call.1} parent=32 // pred_region
              %176 = sst [smem:[#allocation10]] [#allocation9]
              %177 = sst [smem:[#allocation11]] [#allocation8]
            $region39: #{tpu_custom_call.1} parent=32 // pred_fallthru
              _
            %179 = shalt.err (0)
            %s181 = sshll.u32 %s172, 4
            %s182 = int_to_ptr.vmem [resolvable:$true] %s181
            %184 = dma.hbm_to_vmem [thread:$0]  %s169, 16, %s182, %s173
          $region33: #{tpu_custom_call.1} parent=27 // loop_footer
            %s165 = sadd.s32 1, %s161
          $region34: #{tpu_custom_call.1} parent=27 // loop_footer_branch
            %160 = sbr.rel target = $region30
          $region35: #{tpu_custom_call.1} parent=27 // loop_exit
            _
        $region28: #{tpu_custom_call.1} parent=23 // pred_fallthru
          _
        %s185 = sadd.s32 %s28, 1
        %p186 = scmp.lt.s32.totalorder %s185, 1
        // Predicated region
        $region40: #{tpu_custom_call.1} parent=23 // pred_check
          %p187 = pneg %p186
        $region41: #{tpu_custom_call.1} parent=23 // pred_check_branch
          %189 = sbr.rel (%p187) target = $region43
        $region42: #{tpu_custom_call.1} parent=23 // pred_region
          %s190 = sadd.s32 %s142, 1
          %s191 = ssub.s32 1, %s154
          %s192 = smul.u32 %s190, 8
          loop: start=0, step=1, limit=8
          $region44: #{tpu_custom_call.1} parent=42 // loop_pre_header
            _
          $region45: #{tpu_custom_call.1} parent=42 // loop_header
            %s194 = sphi 0, %s198
            %p195 = scmp.ge.s32.totalorder %s194, 8
          $region46: #{tpu_custom_call.1} parent=42 // loop_header_branch
            %197 = sbr.rel (%p195) target = $region50
          $region47: #{tpu_custom_call.1} parent=42 // loop_body
            %s199 = sadd.s32 %s192, %s194
            %s200 = sld [smem:[#allocation5 + %s199]]
            %s201 = smul.addr %s200, 16
            %s202 = scalar_lea.hbm %s2, %s201
            %s203 = smul.u32 %s191, 8
            %s204 = sadd.s32 %s194, %s203
            %s205 = scalar_lea.vmem [#allocation2], %s204
            %s206 = scalar_lea.sflag [#allocation3], %s204
            // Predicated region
            $region51: #{tpu_custom_call.1} parent=47 // pred_check
              _
            $region52: #{tpu_custom_call.1} parent=47 // pred_check_branch
              %208 = sbr.rel target = $region54
            $region53: #{tpu_custom_call.1} parent=47 // pred_region
              %209 = sst [smem:[#allocation10]] [#allocation13]
              %210 = sst [smem:[#allocation11]] [#allocation12]
            $region54: #{tpu_custom_call.1} parent=47 // pred_fallthru
              _
            %212 = shalt.err (0)
            %s214 = sshll.u32 %s205, 4
            %s215 = int_to_ptr.vmem [resolvable:$true] %s214
            %217 = dma.hbm_to_vmem [thread:$0]  %s202, 16, %s215, %s206
          $region48: #{tpu_custom_call.1} parent=42 // loop_footer
            %s198 = sadd.s32 1, %s194
          $region49: #{tpu_custom_call.1} parent=42 // loop_footer_branch
            %193 = sbr.rel target = $region45
          $region50: #{tpu_custom_call.1} parent=42 // loop_exit
            _
        $region43: #{tpu_custom_call.1} parent=23 // pred_fallthru
          _
        loop: start=0, step=1, limit=8
        $region55: #{tpu_custom_call.1} parent=23 // loop_pre_header
          _
        $region56: #{tpu_custom_call.1} parent=23 // loop_header
          %s219 = sphi 0, %s223
          %p220 = scmp.ge.s32.totalorder %s219, 8
        $region57: #{tpu_custom_call.1} parent=23 // loop_header_branch
          %222 = sbr.rel (%p220) target = $region61
        $region58: #{tpu_custom_call.1} parent=23 // loop_body
          %s224 = smul.u32 %s154, 8
          %s225 = sadd.s32 %s219, %s224
          %s226 = scalar_lea.sflag [#allocation3], %s225
          %s227 = smul.u32 1, 1
          %s228 = sshll.u32 %s227, 4
          %229 = dma.done %s226, %s228
        $region59: #{tpu_custom_call.1} parent=23 // loop_footer
          %s223 = sadd.s32 1, %s219
        $region60: #{tpu_custom_call.1} parent=23 // loop_footer_branch
          %218 = sbr.rel target = $region56
        $region61: #{tpu_custom_call.1} parent=23 // loop_exit
          _
        %s230 = smul.u32 %s154, 8
        %s231 = scalar_lea.vmem [#allocation2], %s230
        %v232 = vld [vmem:[%s231] sm:$0xff]
        %v233 = vld [vmem:[%s139] sm:$0xff]
        %235 = vset.pattern.permute.xlu0 0
        %236 = vperm.xlu0 %235, %v233
        %v237 = vpop.permute.xlu0 %236
        %v239 = vmul.f32 %v232, %v237
        %240 = vst [vmem:[%s134] sm:$0xff] %v239
        %s241 = sand.u32 %s73, 1
        %s242 = scalar_lea.sflag [#allocation7], %s241
        %s243 = sand.u32 %s73, 1
        %s244 = smul.addr %s243, 8
        %s245 = scalar_lea.vmem [#allocation6], %s244
        // Predicated region
        $region62: #{tpu_custom_call.1} parent=23 // pred_check
          %p246 = pneg %p83
        $region63: #{tpu_custom_call.1} parent=23 // pred_check_branch
          %248 = sbr.rel (%p246) target = $region65
        $region64: #{tpu_custom_call.1} parent=23 // pred_region
          %s249 = sadd.s32 %s27, %s28
          %s251 = ssub.s32 128, 128
          %252 = vsyncadd %s242, %s251
          %s253 = smul.addr %s249, 128
          %s254 = scalar_lea.hbm %s3, %s253
          %s256 = sshll.u32 %s245, 4
          %s257 = int_to_ptr.vmem [resolvable:$true] %s256
          %259 = dma.vmem_to_hbm [thread:$0]  %s257, 128, %s254, %s242
        $region65: #{tpu_custom_call.1} parent=23 // pred_fallthru
          _
      $region24: #{tpu_custom_call.1} parent=5 // pred_fallthru
        _
      %p260 = scmp.le.s32.totalorder 2, %s18
      // Predicated region
      $region66: #{tpu_custom_call.1} parent=5 // pred_check
        %p261 = pneg %p260
      $region67: #{tpu_custom_call.1} parent=5 // pred_check_branch
        %263 = sbr.rel (%p261) target = $region69
      $region68: #{tpu_custom_call.1} parent=5 // pred_region
        %s264 = ssub.s32 %s18, 2
        // Predicated region
        $region70: #{tpu_custom_call.1} parent=68 // pred_check
          %p265 = pneg %p89
        $region71: #{tpu_custom_call.1} parent=68 // pred_check_branch
          %267 = sbr.rel (%p265) target = $region73
        $region72: #{tpu_custom_call.1} parent=68 // pred_region
          %s268 = sand.u32 %s74, 1
          %s269 = scalar_lea.sflag [#allocation7], %s268
          %s270 = sand.u32 %s74, 1
          %s271 = smul.addr %s270, 8
          %s272 = scalar_lea.vmem [#allocation6], %s271
          %273 = dma.done %s269, 128
        $region73: #{tpu_custom_call.1} parent=68 // pred_fallthru
          _
      $region69: #{tpu_custom_call.1} parent=5 // pred_fallthru
        _
    $region6: #{tpu_custom_call.1} parent=1 // loop_footer
      %s22 = sadd.s32 1, %s18
    $region7: #{tpu_custom_call.1} parent=1 // loop_footer_branch
      %17 = sbr.rel target = $region3
    $region8: #{tpu_custom_call.1} parent=1 // loop_exit
      _
    %274 = vsyncpa [#allocation7], 1
    %s275 = scalar_lea.sflag [#allocation7], 1
    %276 = vsyncpa %s275, 1
  %277 = vsyncmov [#allocation3]
  %s278 = vpop.sfrf %277
  %p279 = scmp.eq.s32.totalorder %s278, 0
  %p280 = pneg %p279
  %282 = shalt.err (%p280)
  %s283 = scalar_lea.sflag [#allocation3], 1
  %284 = vsyncmov %s283
  %s285 = vpop.sfrf %284
  %p286 = scmp.eq.s32.totalorder %s285, 0
  %p287 = pneg %p286
  %289 = shalt.err (%p287)
  %s290 = scalar_lea.sflag [#allocation3], 2
  %291 = vsyncmov %s290
  %s292 = vpop.sfrf %291
  %p293 = scmp.eq.s32.totalorder %s292, 0
  %p294 = pneg %p293
  %296 = shalt.err (%p294)
  %s297 = scalar_lea.sflag [#allocation3], 3
  %298 = vsyncmov %s297
  %s299 = vpop.sfrf %298
  %p300 = scmp.eq.s32.totalorder %s299, 0
  %p301 = pneg %p300
  %303 = shalt.err (%p301)
  %s304 = scalar_lea.sflag [#allocation3], 4
  %305 = vsyncmov %s304
  %s306 = vpop.sfrf %305
  %p307 = scmp.eq.s32.totalorder %s306, 0
  %p308 = pneg %p307
  %310 = shalt.err (%p308)
  %s311 = scalar_lea.sflag [#allocation3], 5
  %312 = vsyncmov %s311
  %s313 = vpop.sfrf %312
  %p314 = scmp.eq.s32.totalorder %s313, 0
  %p315 = pneg %p314
  %317 = shalt.err (%p315)
  %s318 = scalar_lea.sflag [#allocation3], 6
  %319 = vsyncmov %s318
  %s320 = vpop.sfrf %319
  %p321 = scmp.eq.s32.totalorder %s320, 0
  %p322 = pneg %p321
  %324 = shalt.err (%p322)
  %s325 = scalar_lea.sflag [#allocation3], 7
  %326 = vsyncmov %s325
  %s327 = vpop.sfrf %326
  %p328 = scmp.eq.s32.totalorder %s327, 0
  %p329 = pneg %p328
  %331 = shalt.err (%p329)
  %s332 = scalar_lea.sflag [#allocation3], 8
  %333 = vsyncmov %s332
  %s334 = vpop.sfrf %333
  %p335 = scmp.eq.s32.totalorder %s334, 0
  %p336 = pneg %p335
  %338 = shalt.err (%p336)
  %s339 = scalar_lea.sflag [#allocation3], 9
  %340 = vsyncmov %s339
  %s341 = vpop.sfrf %340
  %p342 = scmp.eq.s32.totalorder %s341, 0
  %p343 = pneg %p342
  %345 = shalt.err (%p343)
  %s346 = scalar_lea.sflag [#allocation3], 10
  %347 = vsyncmov %s346
  %s348 = vpop.sfrf %347
  %p349 = scmp.eq.s32.totalorder %s348, 0
  %p350 = pneg %p349
  %352 = shalt.err (%p350)
  %s353 = scalar_lea.sflag [#allocation3], 11
  %354 = vsyncmov %s353
  %s355 = vpop.sfrf %354
  %p356 = scmp.eq.s32.totalorder %s355, 0
  %p357 = pneg %p356
  %359 = shalt.err (%p357)
  %s360 = scalar_lea.sflag [#allocation3], 12
  %361 = vsyncmov %s360
  %s362 = vpop.sfrf %361
  %p363 = scmp.eq.s32.totalorder %s362, 0
  %p364 = pneg %p363
  %366 = shalt.err (%p364)
  %s367 = scalar_lea.sflag [#allocation3], 13
  %368 = vsyncmov %s367
  %s369 = vpop.sfrf %368
  %p370 = scmp.eq.s32.totalorder %s369, 0
  %p371 = pneg %p370
  %373 = shalt.err (%p371)
  %s374 = scalar_lea.sflag [#allocation3], 14
  %375 = vsyncmov %s374
  %s376 = vpop.sfrf %375
  %p377 = scmp.eq.s32.totalorder %s376, 0
  %p378 = pneg %p377
  %380 = shalt.err (%p378)
  %s381 = scalar_lea.sflag [#allocation3], 15
  %382 = vsyncmov %s381
  %s383 = vpop.sfrf %382
  %p384 = scmp.eq.s32.totalorder %s383, 0
  %p385 = pneg %p384
  %387 = shalt.err (%p385)

</llo_original>
